<compile_context>
chip_gen: v7x
topology: tpu7x:2x2x1
jax: 0.10.0
libtpu: 0.0.40
codegen_flags: <defaults>
</compile_context>

<pallas_src>
import functools

import jax
import jax.numpy as jnp
import numpy as np
from jax.experimental import pallas as pl
from jax.experimental.pallas import tpu as pltpu


def _round_up(x, m):
    return ((x + m - 1) // m) * m


def _atdh_kernel(x_ref, w_ref, b_ref, tmask_ref, pmask_ref, o_ref, patch_ref, *,
                 bt, cin_pad, cout, width, hw, hw_pad, front, m_branches,
                 mask_pool):
    """One grid step: bt images packed along lanes.

    x_ref:     (1, cin_pad, front + bt*hw_pad + tail)  bf16 raw input (flat spatial)
    w_ref:     (cout, 9*cin_pad)                        bf16 conv weights (tap-major)
    b_ref:     (cout, 1)                                f32 conv bias
    tmask_ref: (9, bt*hw_pad)                           bf16 0/1 border keep-masks per tap
    pmask_ref: (1, bt*hw_pad)                           f32 1 for real pixels, 0 for pad lanes
    o_ref:     (1, cout, bt*hw_pad)                     output (lane-dense, unmasked stores)
    patch_ref: (9*cin_pad, bt*hw_pad)                   bf16 VMEM scratch (im2col built in VMEM)
    """
    n_out = bt * hw_pad

    # ---- build the 9-tap patch matrix in VMEM (input is read from HBM once) ----
    for dy in range(3):
        for dx in range(3):
            t = dy * 3 + dx
            off = front + (dy - 1) * width + (dx - 1)      # flat-spatial shift of this tap
            tap = x_ref[0, :, pl.ds(off, n_out)]           # (cin_pad, n_out) bf16
            keep = tmask_ref[pl.ds(t, 1), :]               # (1, n_out) bf16, 0 on borders/pad
            patch_ref[pl.ds(t * cin_pad, cin_pad), :] = tap * keep

    # ---- fused 3x3 conv: ONE bf16 MXU matmul, f32 accumulation ----
    U = jnp.dot(w_ref[...], patch_ref[...],
                preferred_element_type=jnp.float32)        # (cout, n_out)
    U = U + b_ref[...]                                     # + bias, broadcast over lanes

    cpm = cout // m_branches
    inv_hw = 1.0 / float(hw)

    # ---- per-image epilogue: avg+max pool, M-branch softmax, rescale ----
    for bi in range(bt):                                   # small static loop (bt is tiny)
        lo = bi * hw_pad
        seg = U[:, lo:lo + hw_pad]                         # lane-aligned slice (cout, hw_pad)
        if mask_pool:
            pm = pmask_ref[:, pl.ds(lo, hw_pad)]           # (1, hw_pad) f32 validity
            avg = jnp.sum(seg * pm, axis=1, keepdims=True) * inv_hw
            mx = jnp.max(jnp.where(pm > 0.5, seg, -3e38), axis=1, keepdims=True)
        else:
            avg = jnp.sum(seg, axis=1, keepdims=True) * inv_hw
            mx = jnp.max(seg, axis=1, keepdims=True)
        z = avg + mx                                       # (cout, 1)

        # softmax over the M-branch axis of z.view(b, M, G, -1): channel c belongs
        # to branch c // (cout // M), so per-branch contiguous slices + elementwise
        # softmax across the slices == softmax(dim=1).
        parts = [z[m * cpm:(m + 1) * cpm, :] for m in range(m_branches)]
        mmax = parts[0]
        for q in parts[1:]:
            mmax = jnp.maximum(mmax, q)
        exps = [jnp.exp(q - mmax) for q in parts]
        den = exps[0]
        for e in exps[1:]:
            den = den + e
        inv = pl.reciprocal(den, approx=True)              # EUP slot
        scale = jnp.concatenate([e * inv for e in exps], axis=0)   # (cout, 1)

        o_ref[0, :, pl.ds(lo, hw_pad)] = (seg * scale).astype(o_ref.dtype)


def _vmem_capacity_bytes():
    try:
        return int(pltpu.get_tpu_info().vmem_capacity_bytes)
    except Exception:
        return 64 * 1024 * 1024            # conservative fallback (v7x per-TC size)


def _per_step_vmem_bytes(bt, hw_pad, pad_lanes, cin_pad, k, cout, out_itemsize):
    n_out = bt * hw_pad
    n_in = n_out + pad_lanes
    in_blk = cin_pad * n_in * 2            # bf16 input block
    w_blk = cout * k * 2                   # bf16 weights
    aux_blk = 9 * n_out * 2 + n_out * 4    # tap masks (bf16) + pool mask (f32)
    out_blk = cout * n_out * out_itemsize
    scratch = k * n_out * 2                # bf16 patch matrix (single-buffered)
    u_val = cout * n_out * 4               # f32 conv result held in VMEM
    # inputs/outputs are double-buffered by the pipeline
    return 2 * (in_blk + w_blk + aux_blk + out_blk + cout * 4) + scratch + u_val


def _pick_bt(B, hw_pad, cout, out_itemsize, fits):
    """Images packed per grid step: largest divisor of B whose blocks fit the VMEM
    byte budget and keep the output block <= ~8 MiB, preferring >= 2 grid steps
    (keeps both v7x TensorCores busy; on 1-TC chips the cost of 2 steps is tiny)."""
    cands = [d for d in range(1, B + 1) if B % d == 0 and fits(d)]
    if 1 not in cands:
        return None
    for need_multi in (True, False):
        sel = [d for d in cands
               if cout * d * hw_pad * out_itemsize <= (8 << 20)
               and (not need_multi or B // d >= 2)]
        if sel:
            return max(sel)
    return 1


def atdh_conv_forward(x_nchw, weight_oihw, bias, *, M=2, G=32,
                      out_dtype=jnp.float32):
    """ATDHConv forward. x_nchw: (B, Cin, H, W) f32. Returns (B, Cout, H, W).

    Set out_dtype=jnp.bfloat16 to halve the HBM write stream when the consumer
    tolerates bf16 activations.
    """
    # TODO(synk): stride > 1 not implemented (module default stride=1 is used).
    B, Cin, H, W = x_nchw.shape
    Cout = weight_oihw.shape[0]
    assert weight_oihw.shape == (Cout, Cin, 3, 3)
    assert Cout % (M * G) == 0, "out_channels must be divisible by M*G"

    HW = H * W
    HW_pad = _round_up(HW, 128)            # lane-dense output, unmasked stores
    Cin_pad = _round_up(Cin, 16)           # bf16 tile-aligned patch rows, K % 16 == 0
    K = 9 * Cin_pad
    margin = _round_up(W + 1, 128)         # front/back lane margin covering tap shifts
    out_itemsize = jnp.dtype(out_dtype).itemsize

    budget = min(_vmem_capacity_bytes(), 128 * 1024 * 1024) // 3
    fits = lambda d: _per_step_vmem_bytes(d, HW_pad, 2 * margin, Cin_pad, K,
                                          Cout, out_itemsize) <= budget
    bt = _pick_bt(B, HW_pad, Cout, out_itemsize, fits)
    if bt is None:
        # TODO(synk): add a spatial (H*W) grid axis (conv + pool-stats pass, then a
        # rescale pass with stats carried in scratch) for very large images.
        raise ValueError("image too large for whole-image blocks on this TPU")
    Bg = B // bt
    n_out = bt * HW_pad
    n_in = n_out + 2 * margin

    # --- pack the raw input: flatten spatial, pad channels + lanes, pack bt images
    #     per grid step along lanes, add front/back margins. One XLA fusion; no 9x
    #     im2col materialization in HBM. ---
    xf = x_nchw.astype(jnp.bfloat16).reshape(B, Cin, HW)
    if Cin_pad > Cin or HW_pad > HW:
        xf = jnp.pad(xf, ((0, 0), (0, Cin_pad - Cin), (0, HW_pad - HW)))
    if bt > 1:
        xf = (xf.reshape(Bg, bt, Cin_pad, HW_pad)
                .transpose(0, 2, 1, 3)
                .reshape(Bg, Cin_pad, n_out))
    else:
        xf = xf.reshape(Bg, Cin_pad, HW_pad)
    xf = jnp.pad(xf, ((0, 0), (0, 0), (margin, margin)))

    # OIHW -> (Cout, dy, dx, Cin_pad) -> (Cout, 9*Cin_pad); column order matches the
    # tap-major patch rows built inside the kernel.
    w_m = jnp.transpose(weight_oihw, (0, 2, 3, 1))
    if Cin_pad > Cin:
        w_m = jnp.pad(w_m, ((0, 0), (0, 0), (0, 0), (0, Cin_pad - Cin)))
    w_m = w_m.reshape(Cout, K).astype(jnp.bfloat16)
    b_col = bias.reshape(Cout, 1).astype(jnp.float32)

    # --- static 0/1 masks (numpy, zero runtime cost): per-tap border keep-masks and
    #     pad-lane validity for the pooling. ---
    p_loc = np.arange(HW_pad)
    yy, xx = p_loc // W, p_loc % W
    valid = p_loc < HW
    keep = np.ones((9, HW_pad), np.float32)
    for dy in range(3):
        for dx in range(3):
            k = valid.copy()
            if dy == 0:
                k &= (yy >= 1)
            if dy == 2:
                k &= (yy <= H - 2)
            if dx == 0:
                k &= (xx >= 1)
            if dx == 2:
                k &= (xx <= W - 2)
            keep[dy * 3 + dx] = k
    tmask = jnp.asarray(np.tile(keep, (1, bt)), dtype=jnp.bfloat16)        # (9, n_out)
    pmask = jnp.asarray(np.tile(valid.astype(np.float32), bt)[None, :])    # (1, n_out)

    need = _per_step_vmem_bytes(bt, HW_pad, 2 * margin, Cin_pad, K, Cout, out_itemsize)
    cap = _vmem_capacity_bytes()
    vmem_limit = int(min(cap * 9 // 10, max(need + (8 << 20), 32 << 20)))

    kernel = functools.partial(
        _atdh_kernel, bt=bt, cin_pad=Cin_pad, cout=Cout, width=W, hw=HW,
        hw_pad=HW_pad, front=margin, m_branches=M, mask_pool=(HW_pad != HW))

    out = pl.pallas_call(
        kernel,
        out_shape=jax.ShapeDtypeStruct((Bg, Cout, n_out), out_dtype),
        grid_spec=pltpu.PrefetchScalarGridSpec(
            num_scalar_prefetch=0,
            grid=(Bg,),
            in_specs=[
                pl.BlockSpec((1, Cin_pad, n_in), lambda i: (i, 0, 0)),
                pl.BlockSpec((Cout, K), lambda i: (0, 0)),
                pl.BlockSpec((Cout, 1), lambda i: (0, 0)),
                pl.BlockSpec((9, n_out), lambda i: (0, 0)),
                pl.BlockSpec((1, n_out), lambda i: (0, 0)),
            ],
            out_specs=pl.BlockSpec((1, Cout, n_out), lambda i: (i, 0, 0)),
            scratch_shapes=[pltpu.VMEM((K, n_out), jnp.bfloat16)],
        ),
        compiler_params=pltpu.CompilerParams(
            dimension_semantics=("parallel",),
            vmem_limit_bytes=vmem_limit),
    )(xf, w_m, b_col, tmask, pmask)

    # --- unpack: (Bg, Cout, bt*HW_pad) -> (B, Cout, H, W) ---
    if bt > 1:
        out = (out.reshape(Bg, Cout, bt, HW_pad)
                  .transpose(0, 2, 1, 3)
                  .reshape(B, Cout, HW_pad))
    else:
        out = out.reshape(B, Cout, HW_pad)
    if HW_pad > HW:
        out = out[:, :, :HW]
    return out.reshape(B, Cout, H, W)


def _reference(x_nchw, weight_oihw, bias, M, G):
    """Pure-JAX reference matching the PyTorch forward exactly (f32)."""
    U = jax.lax.conv_general_dilated(
        x_nchw, weight_oihw, window_strides=(1, 1),
        padding=((1, 1), (1, 1)),
        dimension_numbers=("NCHW", "OIHW", "NCHW"))
    U = U + bias.reshape(1, -1, 1, 1)
    b = U.shape[0]
    avg = jnp.mean(U, axis=(2, 3), keepdims=True)
    mx = jnp.max(U, axis=(2, 3), keepdims=True)
    z = (avg + mx).reshape(b, M, G, -1)
    z = jax.nn.softmax(z, axis=1)
    z = z.reshape(b, -1, 1, 1)
    return U * z


if __name__ == "__main__":
    # Small shapes consistent with the module (out_channels must be a multiple
    # of M*G = 64 for defaults M=2, G=32).
    B, Cin, H, W = 2, 4, 16, 16
    Cout, M, G = 64, 2, 32

    key = jax.random.PRNGKey(0)
    kx, kw, kb = jax.random.split(key, 3)

    x = jax.random.normal(kx, (B, Cin, H, W), jnp.float32)

    # Deterministic PyTorch-Conv2d-style init: U(-1/sqrt(fan_in), 1/sqrt(fan_in)).
    fan_in = Cin * 3 * 3
    bound = 1.0 / (fan_in ** 0.5)
    weight = jax.random.uniform(kw, (Cout, Cin, 3, 3), jnp.float32, -bound, bound)
    bias = jax.random.uniform(kb, (Cout,), jnp.float32, -bound, bound)

    out = atdh_conv_forward(x, weight, bias, M=M, G=G)
    out = jax.block_until_ready(out)
    assert out.shape == (B, Cout, H, W)

    # Check 1: against the exact f32 module semantics (tolerance loosened for
    # the bf16 MXU operands; accumulation stays f32).
    ref_f32 = _reference(x, weight, bias, M, G)
    assert jnp.allclose(out, ref_f32, atol=5e-2, rtol=5e-2), "mismatch vs f32 reference"

    # Check 2 (tight): against the same math with bf16-quantized conv operands,
    # isolating structural errors from operand-rounding error.
    ref_bf16 = _reference(
        x.astype(jnp.bfloat16).astype(jnp.float32),
        weight.astype(jnp.bfloat16).astype(jnp.float32), bias, M, G)
    assert jnp.allclose(out, ref_bf16, atol=1e-2, rtol=1e-2), "mismatch vs bf16 reference"

    print("KERNEL_OK")
</pallas_src>

<mosaic_0001>
module attributes {stable_mosaic.version = 11 : i64} {
  func.func @_atdh_kernel(%arg0: i32, %arg1: memref<1x16x512xbf16, #tpu.memory_space<vmem>>, %arg2: memref<64x144xbf16, #tpu.memory_space<vmem>>, %arg3: memref<64x1xf32, #tpu.memory_space<vmem>>, %arg4: memref<9x256xbf16, #tpu.memory_space<vmem>>, %arg5: memref<1x256xf32, #tpu.memory_space<vmem>>, %arg6: memref<1x64x256xf32, #tpu.memory_space<vmem>>, %arg7: memref<144x256xbf16, #tpu.memory_space<vmem>>) attributes {dimension_semantics = [#tpu.dimension_semantics<parallel>], iteration_bounds = array<i64: 2>, scalar_prefetch = 0 : i64, scratch_operands = 1 : i64, tpu.core_type = #tpu.core_type<tc>, window_params = [{transform_indices = @transform_0, window_bounds = array<i64: 1, 16, 512>}, {pipeline_mode = #tpu.pipeline_mode<synchronous>, transform_indices = @transform_1, window_bounds = array<i64: 64, 144>}, {pipeline_mode = #tpu.pipeline_mode<synchronous>, transform_indices = @transform_2, window_bounds = array<i64: 64, 1>}, {pipeline_mode = #tpu.pipeline_mode<synchronous>, transform_indices = @transform_3, window_bounds = array<i64: 9, 256>}, {pipeline_mode = #tpu.pipeline_mode<synchronous>, transform_indices = @transform_4, window_bounds = array<i64: 1, 256>}, {transform_indices = @transform_5, window_bounds = array<i64: 1, 64, 256>}]} {
    %c0 = arith.constant 0 : index
    %c0_0 = arith.constant 0 : index
    %c111 = arith.constant 111 : index
    %0 = vector.load %arg1[%c0, %c0_0, %c111] : memref<1x16x512xbf16, #tpu.memory_space<vmem>>, vector<1x16x256xbf16>
    %1 = vector.shape_cast %0 : vector<1x16x256xbf16> to vector<16x256xbf16>
    %c0_1 = arith.constant 0 : index
    %c0_2 = arith.constant 0 : index
    %2 = vector.load %arg4[%c0_1, %c0_2] : memref<9x256xbf16, #tpu.memory_space<vmem>>, vector<1x256xbf16>
    %3 = vector.broadcast %2 : vector<1x256xbf16> to vector<16x256xbf16>
    %4 = arith.mulf %1, %3 : vector<16x256xbf16>
    %c0_3 = arith.constant 0 : index
    %c0_4 = arith.constant 0 : index
    %5 = vector.load %arg7[%c0_3, %c0_4] : memref<144x256xbf16, #tpu.memory_space<vmem>>, vector<16x256xbf16>
    tpu.vector_store %arg7[%c0_3, %c0_4], %4 {strides = array<i32>} : memref<144x256xbf16, #tpu.memory_space<vmem>>, vector<16x256xbf16>,
    %c0_5 = arith.constant 0 : index
    %c0_6 = arith.constant 0 : index
    %c112 = arith.constant 112 : index
    %6 = vector.load %arg1[%c0_5, %c0_6, %c112] : memref<1x16x512xbf16, #tpu.memory_space<vmem>>, vector<1x16x256xbf16>
    %7 = vector.shape_cast %6 : vector<1x16x256xbf16> to vector<16x256xbf16>
    %c1 = arith.constant 1 : index
    %c0_7 = arith.constant 0 : index
    %8 = vector.load %arg4[%c1, %c0_7] : memref<9x256xbf16, #tpu.memory_space<vmem>>, vector<1x256xbf16>
    %9 = vector.broadcast %8 : vector<1x256xbf16> to vector<16x256xbf16>
    %10 = arith.mulf %7, %9 : vector<16x256xbf16>
    %c16 = arith.constant 16 : index
    %c0_8 = arith.constant 0 : index
    %11 = vector.load %arg7[%c16, %c0_8] : memref<144x256xbf16, #tpu.memory_space<vmem>>, vector<16x256xbf16>
    tpu.vector_store %arg7[%c16, %c0_8], %10 {strides = array<i32>} : memref<144x256xbf16, #tpu.memory_space<vmem>>, vector<16x256xbf16>,
    %c0_9 = arith.constant 0 : index
    %c0_10 = arith.constant 0 : index
    %c113 = arith.constant 113 : index
    %12 = vector.load %arg1[%c0_9, %c0_10, %c113] : memref<1x16x512xbf16, #tpu.memory_space<vmem>>, vector<1x16x256xbf16>
    %13 = vector.shape_cast %12 : vector<1x16x256xbf16> to vector<16x256xbf16>
    %c2 = arith.constant 2 : index
    %c0_11 = arith.constant 0 : index
    %14 = vector.load %arg4[%c2, %c0_11] : memref<9x256xbf16, #tpu.memory_space<vmem>>, vector<1x256xbf16>
    %15 = vector.broadcast %14 : vector<1x256xbf16> to vector<16x256xbf16>
    %16 = arith.mulf %13, %15 : vector<16x256xbf16>
    %c32 = arith.constant 32 : index
    %c0_12 = arith.constant 0 : index
    %17 = vector.load %arg7[%c32, %c0_12] : memref<144x256xbf16, #tpu.memory_space<vmem>>, vector<16x256xbf16>
    tpu.vector_store %arg7[%c32, %c0_12], %16 {strides = array<i32>} : memref<144x256xbf16, #tpu.memory_space<vmem>>, vector<16x256xbf16>,
    %c0_13 = arith.constant 0 : index
    %c0_14 = arith.constant 0 : index
    %c127 = arith.constant 127 : index
    %18 = vector.load %arg1[%c0_13, %c0_14, %c127] : memref<1x16x512xbf16, #tpu.memory_space<vmem>>, vector<1x16x256xbf16>
    %19 = vector.shape_cast %18 : vector<1x16x256xbf16> to vector<16x256xbf16>
    %c3 = arith.constant 3 : index
    %c0_15 = arith.constant 0 : index
    %20 = vector.load %arg4[%c3, %c0_15] : memref<9x256xbf16, #tpu.memory_space<vmem>>, vector<1x256xbf16>
    %21 = vector.broadcast %20 : vector<1x256xbf16> to vector<16x256xbf16>
    %22 = arith.mulf %19, %21 : vector<16x256xbf16>
    %c48 = arith.constant 48 : index
    %c0_16 = arith.constant 0 : index
    %23 = vector.load %arg7[%c48, %c0_16] : memref<144x256xbf16, #tpu.memory_space<vmem>>, vector<16x256xbf16>
    tpu.vector_store %arg7[%c48, %c0_16], %22 {strides = array<i32>} : memref<144x256xbf16, #tpu.memory_space<vmem>>, vector<16x256xbf16>,
    %c0_17 = arith.constant 0 : index
    %c0_18 = arith.constant 0 : index
    %c128 = arith.constant 128 : index
    %24 = vector.load %arg1[%c0_17, %c0_18, %c128] : memref<1x16x512xbf16, #tpu.memory_space<vmem>>, vector<1x16x256xbf16>
    %25 = vector.shape_cast %24 : vector<1x16x256xbf16> to vector<16x256xbf16>
    %c4 = arith.constant 4 : index
    %c0_19 = arith.constant 0 : index
    %26 = vector.load %arg4[%c4, %c0_19] : memref<9x256xbf16, #tpu.memory_space<vmem>>, vector<1x256xbf16>
    %27 = vector.broadcast %26 : vector<1x256xbf16> to vector<16x256xbf16>
    %28 = arith.mulf %25, %27 : vector<16x256xbf16>
    %c64 = arith.constant 64 : index
    %c0_20 = arith.constant 0 : index
    %29 = vector.load %arg7[%c64, %c0_20] : memref<144x256xbf16, #tpu.memory_space<vmem>>, vector<16x256xbf16>
    tpu.vector_store %arg7[%c64, %c0_20], %28 {strides = array<i32>} : memref<144x256xbf16, #tpu.memory_space<vmem>>, vector<16x256xbf16>,
    %c0_21 = arith.constant 0 : index
    %c0_22 = arith.constant 0 : index
    %c129 = arith.constant 129 : index
    %30 = vector.load %arg1[%c0_21, %c0_22, %c129] : memref<1x16x512xbf16, #tpu.memory_space<vmem>>, vector<1x16x256xbf16>
    %31 = vector.shape_cast %30 : vector<1x16x256xbf16> to vector<16x256xbf16>
    %c5 = arith.constant 5 : index
    %c0_23 = arith.constant 0 : index
    %32 = vector.load %arg4[%c5, %c0_23] : memref<9x256xbf16, #tpu.memory_space<vmem>>, vector<1x256xbf16>
    %33 = vector.broadcast %32 : vector<1x256xbf16> to vector<16x256xbf16>
    %34 = arith.mulf %31, %33 : vector<16x256xbf16>
    %c80 = arith.constant 80 : index
    %c0_24 = arith.constant 0 : index
    %35 = vector.load %arg7[%c80, %c0_24] : memref<144x256xbf16, #tpu.memory_space<vmem>>, vector<16x256xbf16>
    tpu.vector_store %arg7[%c80, %c0_24], %34 {strides = array<i32>} : memref<144x256xbf16, #tpu.memory_space<vmem>>, vector<16x256xbf16>,
    %c0_25 = arith.constant 0 : index
    %c0_26 = arith.constant 0 : index
    %c143 = arith.constant 143 : index
    %36 = vector.load %arg1[%c0_25, %c0_26, %c143] : memref<1x16x512xbf16, #tpu.memory_space<vmem>>, vector<1x16x256xbf16>
    %37 = vector.shape_cast %36 : vector<1x16x256xbf16> to vector<16x256xbf16>
    %c6 = arith.constant 6 : index
    %c0_27 = arith.constant 0 : index
    %38 = vector.load %arg4[%c6, %c0_27] : memref<9x256xbf16, #tpu.memory_space<vmem>>, vector<1x256xbf16>
    %39 = vector.broadcast %38 : vector<1x256xbf16> to vector<16x256xbf16>
    %40 = arith.mulf %37, %39 : vector<16x256xbf16>
    %c96 = arith.constant 96 : index
    %c0_28 = arith.constant 0 : index
    %41 = vector.load %arg7[%c96, %c0_28] : memref<144x256xbf16, #tpu.memory_space<vmem>>, vector<16x256xbf16>
    tpu.vector_store %arg7[%c96, %c0_28], %40 {strides = array<i32>} : memref<144x256xbf16, #tpu.memory_space<vmem>>, vector<16x256xbf16>,
    %c0_29 = arith.constant 0 : index
    %c0_30 = arith.constant 0 : index
    %c144 = arith.constant 144 : index
    %42 = vector.load %arg1[%c0_29, %c0_30, %c144] : memref<1x16x512xbf16, #tpu.memory_space<vmem>>, vector<1x16x256xbf16>
    %43 = vector.shape_cast %42 : vector<1x16x256xbf16> to vector<16x256xbf16>
    %c7 = arith.constant 7 : index
    %c0_31 = arith.constant 0 : index
    %44 = vector.load %arg4[%c7, %c0_31] : memref<9x256xbf16, #tpu.memory_space<vmem>>, vector<1x256xbf16>
    %45 = vector.broadcast %44 : vector<1x256xbf16> to vector<16x256xbf16>
    %46 = arith.mulf %43, %45 : vector<16x256xbf16>
    %c112_32 = arith.constant 112 : index
    %c0_33 = arith.constant 0 : index
    %47 = vector.load %arg7[%c112_32, %c0_33] : memref<144x256xbf16, #tpu.memory_space<vmem>>, vector<16x256xbf16>
    tpu.vector_store %arg7[%c112_32, %c0_33], %46 {strides = array<i32>} : memref<144x256xbf16, #tpu.memory_space<vmem>>, vector<16x256xbf16>,
    %c0_34 = arith.constant 0 : index
    %c0_35 = arith.constant 0 : index
    %c145 = arith.constant 145 : index
    %48 = vector.load %arg1[%c0_34, %c0_35, %c145] : memref<1x16x512xbf16, #tpu.memory_space<vmem>>, vector<1x16x256xbf16>
    %49 = vector.shape_cast %48 : vector<1x16x256xbf16> to vector<16x256xbf16>
    %c8 = arith.constant 8 : index
    %c0_36 = arith.constant 0 : index
    %50 = vector.load %arg4[%c8, %c0_36] : memref<9x256xbf16, #tpu.memory_space<vmem>>, vector<1x256xbf16>
    %51 = vector.broadcast %50 : vector<1x256xbf16> to vector<16x256xbf16>
    %52 = arith.mulf %49, %51 : vector<16x256xbf16>
    %c128_37 = arith.constant 128 : index
    %c0_38 = arith.constant 0 : index
    %53 = vector.load %arg7[%c128_37, %c0_38] : memref<144x256xbf16, #tpu.memory_space<vmem>>, vector<16x256xbf16>
    tpu.vector_store %arg7[%c128_37, %c0_38], %52 {strides = array<i32>} : memref<144x256xbf16, #tpu.memory_space<vmem>>, vector<16x256xbf16>,
    %c0_39 = arith.constant 0 : index
    %c0_40 = arith.constant 0 : index
    %54 = vector.load %arg2[%c0_39, %c0_40] : memref<64x144xbf16, #tpu.memory_space<vmem>>, vector<64x144xbf16>
    %c0_41 = arith.constant 0 : index
    %c0_42 = arith.constant 0 : index
    %55 = vector.load %arg7[%c0_41, %c0_42] : memref<144x256xbf16, #tpu.memory_space<vmem>>, vector<144x256xbf16>
    %cst = arith.constant dense<0.000000e+00> : vector<64x256xf32>
    %56 = tpu.matmul %54, %55, %cst {dimension_numbers = #tpu.dot_dimension_numbers<[1], [0], [0], [1], [0, 0, 1, 1], [], []>} : vector<64x144xbf16>, vector<144x256xbf16>, vector<64x256xf32> -> vector<64x256xf32>
    %c0_43 = arith.constant 0 : index
    %c0_44 = arith.constant 0 : index
    %57 = vector.load %arg3[%c0_43, %c0_44] : memref<64x1xf32, #tpu.memory_space<vmem>>, vector<64x1xf32>
    %58 = vector.broadcast %57 : vector<64x1xf32> to vector<64x256xf32>
    %59 = arith.addf %56, %58 : vector<64x256xf32>
    %cst_45 = arith.constant dense<0.000000e+00> : vector<64xf32>
    %60 = vector.multi_reduction <add>, %59, %cst_45 [1] : vector<64x256xf32> to vector<64xf32>
    %61 = vector.shape_cast %60 : vector<64xf32> to vector<64x1xf32>
    %cst_46 = arith.constant 3.906250e-03 : f32
    %62 = vector.broadcast %cst_46 : f32 to vector<64x1xf32>
    %63 = arith.mulf %61, %62 : vector<64x1xf32>
    %cst_47 = arith.constant dense<0xFF800000> : vector<64xf32>
    %64 = vector.multi_reduction <maximumf>, %59, %cst_47 [1] : vector<64x256xf32> to vector<64xf32>
    %65 = vector.shape_cast %64 : vector<64xf32> to vector<64x1xf32>
    %66 = arith.addf %63, %65 : vector<64x1xf32>
    %67 = vector.extract_strided_slice %66 {offsets = [0, 0], sizes = [32, 1], strides = [1, 1]} : vector<64x1xf32> to vector<32x1xf32>
    %68 = vector.extract_strided_slice %66 {offsets = [32, 0], sizes = [32, 1], strides = [1, 1]} : vector<64x1xf32> to vector<32x1xf32>
    %69 = arith.maximumf %67, %68 : vector<32x1xf32>
    %70 = arith.subf %67, %69 : vector<32x1xf32>
    %71 = math.exp %70 : vector<32x1xf32>
    %72 = arith.subf %68, %69 : vector<32x1xf32>
    %73 = math.exp %72 : vector<32x1xf32>
    %74 = arith.addf %71, %73 : vector<32x1xf32>
    %75 = tpu.reciprocal %74 {approx = true} : vector<32x1xf32> -> vector<32x1xf32>
    %76 = arith.mulf %71, %75 : vector<32x1xf32>
    %77 = arith.mulf %73, %75 : vector<32x1xf32>
    %78 = tpu.concatenate %76, %77 in 0 : vector<32x1xf32>, vector<32x1xf32> -> vector<64x1xf32>
    %79 = vector.broadcast %78 : vector<64x1xf32> to vector<64x256xf32>
    %80 = arith.mulf %59, %79 : vector<64x256xf32>
    %c0_48 = arith.constant 0 : index
    %c0_49 = arith.constant 0 : index
    %c0_50 = arith.constant 0 : index
    %81 = vector.load %arg6[%c0_48, %c0_49, %c0_50] : memref<1x64x256xf32, #tpu.memory_space<vmem>>, vector<1x64x256xf32>
    %82 = vector.shape_cast %81 : vector<1x64x256xf32> to vector<64x256xf32>
    %83 = vector.shape_cast %80 : vector<64x256xf32> to vector<1x64x256xf32>
    tpu.vector_store %arg6[%c0_48, %c0_49, %c0_50], %83 {strides = array<i32>} : memref<1x64x256xf32, #tpu.memory_space<vmem>>, vector<1x64x256xf32>,
    return
  }
  func.func @transform_0(%arg0: i32) -> (i32, i32, i32) {
    %c0_i32 = arith.constant 0 : i32
    %c0_i32_0 = arith.constant 0 : i32
    %c0_i32_1 = arith.constant 0 : i32
    return %arg0, %c0_i32, %c0_i32_0 : i32, i32, i32
  }
  func.func @transform_1(%arg0: i32) -> (i32, i32) {
    %c0_i32 = arith.constant 0 : i32
    %c0_i32_0 = arith.constant 0 : i32
    %c0_i32_1 = arith.constant 0 : i32
    return %c0_i32, %c0_i32_0 : i32, i32
  }
  func.func @transform_2(%arg0: i32) -> (i32, i32) {
    %c0_i32 = arith.constant 0 : i32
    %c0_i32_0 = arith.constant 0 : i32
    %c0_i32_1 = arith.constant 0 : i32
    return %c0_i32, %c0_i32_0 : i32, i32
  }
  func.func @transform_3(%arg0: i32) -> (i32, i32) {
    %c0_i32 = arith.constant 0 : i32
    %c0_i32_0 = arith.constant 0 : i32
    %c0_i32_1 = arith.constant 0 : i32
    return %c0_i32, %c0_i32_0 : i32, i32
  }
  func.func @transform_4(%arg0: i32) -> (i32, i32) {
    %c0_i32 = arith.constant 0 : i32
    %c0_i32_0 = arith.constant 0 : i32
    %c0_i32_1 = arith.constant 0 : i32
    return %c0_i32, %c0_i32_0 : i32, i32
  }
  func.func @transform_5(%arg0: i32) -> (i32, i32, i32) {
    %c0_i32 = arith.constant 0 : i32
    %c0_i32_0 = arith.constant 0 : i32
    %c0_i32_1 = arith.constant 0 : i32
    return %arg0, %c0_i32, %c0_i32_0 : i32, i32, i32
  }
}

</mosaic_0001>

<llo_original>
// kernel: tpu_custom_call.1
$region0: #{tpu_custom_call.1}
  #allocation0 [shape = 'u32[]', space=smem, size = 0x4, offset = 0x4, fixed_abs, tag = 'smem constant byte address 0x4 - core index']
  #allocation1 [shape = 'u32[144,128]{1,0:T(1,128)}', space=vmem, size = 0x12000, scoped, tag = 'internal scratch']
  #allocation2 [shape = 'bf16[144,256]{1,0:T(16,128)(2,1)}', space=vmem, size = 0x12000, scoped, tag = 'scratch operand']
  %s0 = inlined_call_operand.vmem [shape: bf16[2,16,512], index: 0, kind: input, shape index: {}]
  %s1 = inlined_call_operand.hbm [shape: bf16[64,144], index: 1, kind: input, shape index: {}]
  %s2 = inlined_call_operand.vmem [shape: f32[64,1], index: 2, kind: input, shape index: {}]
  %s3 = inlined_call_operand.hbm [shape: bf16[9,256], index: 3, kind: input, shape index: {}]
  %s4 = inlined_call_operand.vmem [shape: f32[1,256], index: 4, kind: input, shape index: {}]
  %s5 = inlined_call_operand.hbm [shape: f32[2,64,256], index: 5, kind: output, shape index: {}]
  %s6 = sld [smem:[#allocation0]]
  $region61: #{tpu_custom_call.1} parent=0
    _
  %s8 = ssub.s32 1, %s6
  %s9 = scalar_select 0, %s8, %s6
  $region1: #{tpu_custom_call.1} parent=0
    #allocation3 [shape = 'u8[32768]{0}', space=vmem, size = 0x8000, scoped, tag = 'input window, operand 1, single buffered']
    #allocation4 [shape = 's32[2]{0}', space=sflag, size = 0x8, scoped, tag = 'scoped memory for tpu_custom_call.1']
    #allocation5 [shape = 's32[2]{0}', space=sflag, size = 0x8, scoped, tag = 'scoped memory for tpu_custom_call.1']
    #allocation6 [shape = 'u8[8192]{0}', space=vmem, size = 0x2000, scoped, tag = 'input window, operand 3, single buffered']
    #allocation7 [shape = 's32[1]{0}', space=sflag, size = 0x4, scoped, tag = 'scoped memory for tpu_custom_call.1']
    #allocation8 [shape = 'u8[131072]{0}', space=vmem, size = 0x20000, scoped, tag = 'output window, operand 0']
    %10 = vsyncpa [#allocation4], 0
    %11 = vsyncpa [#allocation7], 0
    %12 = vsyncpa [#allocation5], 0
    %s13 = scalar_lea.sflag [#allocation5], 1
    %14 = vsyncpa %s13, 0
    loop: start=0, step=1, limit=4
    $region2: #{tpu_custom_call.1} parent=1 // loop_pre_header
      _
    $region3: #{tpu_custom_call.1} parent=1 // loop_header
      %s16 = sphi 0, %s20
      %p17 = scmp.ge.s32.totalorder %s16, 4
      %s26 = sphi 0, %s28
      %s29 = sphi 0, %s26
      %s30 = sphi 0, %s29
      %s46 = sphi 0, %s30
      %s50 = sphi 0, %s50
      %s52 = sphi 0, %s50
      %s53 = sphi 0, %s52
      %s67 = sphi 0, %s53
      %s71 = sphi 0, %s71
      %s73 = sphi 0, %s71
      %s74 = sphi 0, %s73
      %s88 = sphi 0, %s74
      %s92 = sphi 0, %s92
      %s94 = sphi 0, %s92
      %s95 = sphi 0, %s94
      %s109 = sphi 0, %s95
      %s113 = sphi 0, %s113
      %s115 = sphi 0, %s113
      %s116 = sphi 0, %s115
      %s130 = sphi 0, %s116
      %s136 = sphi 0, %s138
      %s139 = sphi 0, %s136
      %s140 = sphi 0, %s139
      %s156 = sphi 0, %s140
    $region4: #{tpu_custom_call.1} parent=1 // loop_header_branch
      %19 = sbr.rel (%p17) target = $region8
    $region5: #{tpu_custom_call.1} parent=1 // loop_body
      %s21 = ssub.s32 %s16, 1
      %s22 = ssub.s32 %s16, 2
      %s23 = sadd.s32 %s16, 1
      %s24 = ssub.s32 %s16, %s23
      %p25 = scmp.eq.s32.totalorder %s24, 0
      %s27 = sadd.s32 %s26, 1
      %s28 = scalar_select %p25, %s26, %s27
      %p31 = pneg %p25
      %p32 = scmp.eq.s32.totalorder %s16, 1
      %p33 = por %p31, %p32
      %p34 = scmp.ne.s32.totalorder %s26, %s29
      %p35 = scmp.eq.s32.totalorder %s16, 0
      %p36 = por %p34, %p35
      %p37 = scmp.ne.s32.totalorder %s26, %s29
      %p38 = scmp.eq.s32.totalorder %s21, 1
      %p39 = por %p37, %p38
      %p40 = scmp.ne.s32.totalorder %s29, %s30
      %p41 = scmp.eq.s32.totalorder %s21, 0
      %p42 = por %p40, %p41
      %p43 = scmp.ne.s32.totalorder %s29, %s30
      %p44 = scmp.eq.s32.totalorder %s22, 1
      %p45 = por %p43, %p44
      %p47 = scmp.ne.s32.totalorder %s30, %s46
      %p48 = scmp.eq.s32.totalorder %s22, 0
      %p49 = por %p47, %p48
      %s51 = sadd.s32 %s50, 1
      %p54 = scmp.eq.s32.totalorder %s16, 1
      %p55 = scmp.ne.s32.totalorder %s50, %s52
      %p56 = scmp.eq.s32.totalorder %s16, 0
      %p57 = por %p55, %p56
      %p58 = scmp.ne.s32.totalorder %s50, %s52
      %p59 = scmp.eq.s32.totalorder %s21, 1
      %p60 = por %p58, %p59
      %p61 = scmp.ne.s32.totalorder %s52, %s53
      %p62 = scmp.eq.s32.totalorder %s21, 0
      %p63 = por %p61, %p62
      %p64 = scmp.ne.s32.totalorder %s52, %s53
      %p65 = scmp.eq.s32.totalorder %s22, 1
      %p66 = por %p64, %p65
      %p68 = scmp.ne.s32.totalorder %s53, %s67
      %p69 = scmp.eq.s32.totalorder %s22, 0
      %p70 = por %p68, %p69
      %s72 = sadd.s32 %s71, 1
      %p75 = scmp.eq.s32.totalorder %s16, 1
      %p76 = scmp.ne.s32.totalorder %s71, %s73
      %p77 = scmp.eq.s32.totalorder %s16, 0
      %p78 = por %p76, %p77
      %p79 = scmp.ne.s32.totalorder %s71, %s73
      %p80 = scmp.eq.s32.totalorder %s21, 1
      %p81 = por %p79, %p80
      %p82 = scmp.ne.s32.totalorder %s73, %s74
      %p83 = scmp.eq.s32.totalorder %s21, 0
      %p84 = por %p82, %p83
      %p85 = scmp.ne.s32.totalorder %s73, %s74
      %p86 = scmp.eq.s32.totalorder %s22, 1
      %p87 = por %p85, %p86
      %p89 = scmp.ne.s32.totalorder %s74, %s88
      %p90 = scmp.eq.s32.totalorder %s22, 0
      %p91 = por %p89, %p90
      %s93 = sadd.s32 %s92, 1
      %p96 = scmp.eq.s32.totalorder %s16, 1
      %p97 = scmp.ne.s32.totalorder %s92, %s94
      %p98 = scmp.eq.s32.totalorder %s16, 0
      %p99 = por %p97, %p98
      %p100 = scmp.ne.s32.totalorder %s92, %s94
      %p101 = scmp.eq.s32.totalorder %s21, 1
      %p102 = por %p100, %p101
      %p103 = scmp.ne.s32.totalorder %s94, %s95
      %p104 = scmp.eq.s32.totalorder %s21, 0
      %p105 = por %p103, %p104
      %p106 = scmp.ne.s32.totalorder %s94, %s95
      %p107 = scmp.eq.s32.totalorder %s22, 1
      %p108 = por %p106, %p107
      %p110 = scmp.ne.s32.totalorder %s95, %s109
      %p111 = scmp.eq.s32.totalorder %s22, 0
      %p112 = por %p110, %p111
      %s114 = sadd.s32 %s113, 1
      %p117 = scmp.eq.s32.totalorder %s16, 1
      %p118 = scmp.ne.s32.totalorder %s113, %s115
      %p119 = scmp.eq.s32.totalorder %s16, 0
      %p120 = por %p118, %p119
      %p121 = scmp.ne.s32.totalorder %s113, %s115
      %p122 = scmp.eq.s32.totalorder %s21, 1
      %p123 = por %p121, %p122
      %p124 = scmp.ne.s32.totalorder %s115, %s116
      %p125 = scmp.eq.s32.totalorder %s21, 0
      %p126 = por %p124, %p125
      %p127 = scmp.ne.s32.totalorder %s115, %s116
      %p128 = scmp.eq.s32.totalorder %s22, 1
      %p129 = por %p127, %p128
      %p131 = scmp.ne.s32.totalorder %s116, %s130
      %p132 = scmp.eq.s32.totalorder %s22, 0
      %p133 = por %p131, %p132
      %s134 = ssub.s32 %s16, %s23
      %p135 = scmp.eq.s32.totalorder %s134, 0
      %s137 = sadd.s32 %s136, 1
      %s138 = scalar_select %p135, %s136, %s137
      %p141 = pneg %p135
      %p142 = scmp.eq.s32.totalorder %s16, 1
      %p143 = por %p141, %p142
      %p144 = scmp.ne.s32.totalorder %s136, %s139
      %p145 = scmp.eq.s32.totalorder %s16, 0
      %p146 = por %p144, %p145
      %p147 = scmp.ne.s32.totalorder %s136, %s139
      %p148 = scmp.eq.s32.totalorder %s21, 1
      %p149 = por %p147, %p148
      %p150 = scmp.ne.s32.totalorder %s139, %s140
      %p151 = scmp.eq.s32.totalorder %s21, 0
      %p152 = por %p150, %p151
      %p153 = scmp.ne.s32.totalorder %s139, %s140
      %p154 = scmp.eq.s32.totalorder %s22, 1
      %p155 = por %p153, %p154
      %p157 = scmp.ne.s32.totalorder %s140, %s156
      %p158 = scmp.eq.s32.totalorder %s22, 0
      %p159 = por %p157, %p158
      %p160 = scmp.le.s32.totalorder 1, %s16
      %p161 = scmp.lt.s32.totalorder %s16, 3
      %p162 = pnand %p160, %p161
      %p163 = pneg %p162
      // Predicated region
      $region9: #{tpu_custom_call.1} parent=5 // pred_check
        _
      $region10: #{tpu_custom_call.1} parent=5 // pred_check_branch
        %165 = sbr.rel (%p162) target = $region12
      $region11: #{tpu_custom_call.1} parent=5 // pred_region
        %s166 = ssub.s32 %s16, 1
        // Predicated region
        $region13: #{tpu_custom_call.1} parent=11 // pred_check
          %p167 = pneg %p63
        $region14: #{tpu_custom_call.1} parent=11 // pred_check_branch
          %169 = sbr.rel (%p167) target = $region16
        $region15: #{tpu_custom_call.1} parent=11 // pred_region
          %s171 = ssub.s32 1024, 1024
          %172 = vsyncadd [#allocation4], %s171
          %s173 = sshll.u32 [#allocation3], 4
          %s174 = int_to_ptr.vmem [resolvable:$true] %s173
          %179 = dma.hbm_to_vmem [thread:$0]  %s1, 1024, %s174, [#allocation4], 128, 128, 8
        $region16: #{tpu_custom_call.1} parent=11 // pred_fallthru
          _
        // Predicated region
        $region17: #{tpu_custom_call.1} parent=11 // pred_check
          %p180 = pneg %p84
        $region18: #{tpu_custom_call.1} parent=11 // pred_check_branch
          %182 = sbr.rel (%p180) target = $region20
        $region19: #{tpu_custom_call.1} parent=11 // pred_region
          _
        $region20: #{tpu_custom_call.1} parent=11 // pred_fallthru
          _
        // Predicated region
        $region21: #{tpu_custom_call.1} parent=11 // pred_check
          %p183 = pneg %p105
        $region22: #{tpu_custom_call.1} parent=11 // pred_check_branch
          %185 = sbr.rel (%p183) target = $region24
        $region23: #{tpu_custom_call.1} parent=11 // pred_region
          %s187 = ssub.s32 256, 256
          %188 = vsyncadd [#allocation7], %s187
          %s189 = sshll.u32 [#allocation6], 4
          %s190 = int_to_ptr.vmem [resolvable:$true] %s189
          %195 = dma.hbm_to_vmem [thread:$0]  %s3, 256, %s190, [#allocation7], 128, 128, 8
        $region24: #{tpu_custom_call.1} parent=11 // pred_fallthru
          _
        // Predicated region
        $region25: #{tpu_custom_call.1} parent=11 // pred_check
          %p196 = pneg %p126
        $region26: #{tpu_custom_call.1} parent=11 // pred_check_branch
          %198 = sbr.rel (%p196) target = $region28
        $region27: #{tpu_custom_call.1} parent=11 // pred_region
          _
        $region28: #{tpu_custom_call.1} parent=11 // pred_fallthru
          _
      $region12: #{tpu_custom_call.1} parent=5 // pred_fallthru
        _
      %p199 = scmp.lt.s32.totalorder %s16, 2
      // Predicated region
      $region29: #{tpu_custom_call.1} parent=5 // pred_check
        %p200 = pneg %p199
      $region30: #{tpu_custom_call.1} parent=5 // pred_check_branch
        %202 = sbr.rel (%p200) target = $region32
      $region31: #{tpu_custom_call.1} parent=5 // pred_region
        // Predicated region
        $region33: #{tpu_custom_call.1} parent=31 // pred_check
          %p203 = pneg %p36
        $region34: #{tpu_custom_call.1} parent=31 // pred_check_branch
          %205 = sbr.rel (%p203) target = $region36
        $region35: #{tpu_custom_call.1} parent=31 // pred_region
          %p206 = scmp.lt.s32.totalorder %s16, 1
          %s207 = scalar_select %p206, %s16, 1
          %s208 = smul.addr %s207, 8
          %s209 = smul.addr %s208, 4
          %s210 = scalar_lea.vmem %s0, %s209
        $region36: #{tpu_custom_call.1} parent=31 // pred_fallthru
          _
      $region32: #{tpu_custom_call.1} parent=5 // pred_fallthru
        _
      %p211 = scmp.le.s32.totalorder 1, %s16
      %p212 = scmp.lt.s32.totalorder %s16, 3
      %p213 = pnand %p211, %p212
      %p214 = pneg %p213
      // Predicated region
      $region37: #{tpu_custom_call.1} parent=5 // pred_check
        _
      $region38: #{tpu_custom_call.1} parent=5 // pred_check_branch
        %216 = sbr.rel (%p213) target = $region40
      $region39: #{tpu_custom_call.1} parent=5 // pred_region
        %s217 = ssub.s32 %s16, 1
        // Predicated region
        $region41: #{tpu_custom_call.1} parent=39 // pred_check
          %p218 = pneg %p63
        $region42: #{tpu_custom_call.1} parent=39 // pred_check_branch
          %220 = sbr.rel (%p218) target = $region44
        $region43: #{tpu_custom_call.1} parent=39 // pred_region
          %221 = dma.done [#allocation4], 1024
        $region44: #{tpu_custom_call.1} parent=39 // pred_fallthru
          _
        // Predicated region
        $region45: #{tpu_custom_call.1} parent=39 // pred_check
          %p222 = pneg %p105
        $region46: #{tpu_custom_call.1} parent=39 // pred_check_branch
          %224 = sbr.rel (%p222) target = $region48
        $region47: #{tpu_custom_call.1} parent=39 // pred_region
          %225 = dma.done [#allocation7], 256
        $region48: #{tpu_custom_call.1} parent=39 // pred_fallthru
          _
        %p226 = scmp.lt.s32.totalorder %s21, 1
        %s227 = scalar_select %p226, %s21, 1
        %s228 = smul.addr %s227, 8
        %s229 = smul.addr %s228, 4
        %s230 = scalar_lea.vmem %s0, %s229
        %p231 = pneg %p42
        %p232 = pneg %p39
        %p233 = pneg %p63
        %p234 = pneg %p60
        %p235 = pneg %p84
        %p236 = pneg %p81
        %p237 = pneg %p105
        %p238 = pneg %p102
        %p239 = pneg %p126
        %p240 = pneg %p123
        %p241 = pneg %p152
        %p242 = pneg %p149
        %s243 = sand.u32 %s139, 1
        %s244 = scalar_lea.sflag [#allocation5], %s243
        %s245 = sand.u32 %s139, 1
        %s246 = smul.addr %s245, 128
        %s247 = scalar_lea.vmem [#allocation8], %s246
        %p248 = scmp.lt.s32.totalorder %s21, 1
        %s249 = scalar_select %p248, %s21, 1
        %s250 = smul.addr %s249, 8
        %s251 = smul.addr %s250, 4
        %s252 = scalar_lea.vmem %s0, %s251
        %v254 = vld [vmem:[%s252] sm:$0xff]
        %v255 = vld [vmem:[%s252 + $0x8] sm:$0xf]
        %v256 = vld [vmem:[%s252 + $0x10] sm:$0xff]
        %v257 = vld [vmem:[%s252 + $0x18] sm:$0xf]
        %v258 = vld [vmem:[#allocation6] sm:$0x11]
        %v260 = vunpack.c.l.b16 %v258
        %v261 = vunpack.c.h.b16 %v258
        %v262 = vpack.c.b16 %v260, %v260
        %v263 = vpack.c.b16 %v261, %v261
        %v265 = vpack.i.b16 %v262, %v262
        %v267 = vlaneseq
        %v268 = vshrl.u32 %v267, 7
        %v269 = vsub.s32 0, %v268
        %v270 = vrot.slane %v265, %v269
        %v272 = vpack.i.b16 %v263, %v263
        %v274 = vlaneseq
        %v275 = vshrl.u32 %v274, 7
        %v276 = vsub.s32 0, %v275
        %v277 = vrot.slane %v272, %v276
        %v280 = vunpack.c.l.b16 %v270
        %v281 = vunpack.c.l.b16 %v277
        %v282 = vpack.c.b16 %v281, %v280
        %283 = vrot.lane.b32.xlu0 %v282, 111
        %v284 = vpop.permute.xlu0 %283
        %v285 = vrot.slane %v284, 4
        %vm286 = vcmask 908288
        %v287 = vsel %vm286, %v285, %v284
        %v290 = vmul.bf16 %v254, %v287
        %v291 = vmul.bf16 %v255, %v285
        %v292 = vmul.bf16 %v256, %v287
        %v293 = vmul.bf16 %v257, %v285
        %v298 = vunpack.c.l.b16 %v290
        %v299 = vunpack.c.h.b16 %v290
        %v300 = vunpack.c.l.b16 %v291
        %v301 = vunpack.c.l.b16 %v292
        %v302 = vunpack.c.h.b16 %v292
        %v303 = vunpack.c.l.b16 %v293
        %v304 = vpack.c.b16 %v301, %v298
        %v305 = vpack.c.b16 %v302, %v299
        %v306 = vpack.c.b16 %v303, %v300
        %307 = vrot.lane.b32.xlu0 %v304, 17
        %v308 = vpop.permute.xlu0 %307
        %309 = vrot.lane.b32.xlu0 %v305, 17
        %v310 = vpop.permute.xlu0 %309
        %311 = vrot.lane.b32.xlu0 %v306, 17
        %v312 = vpop.permute.xlu0 %311
        %vm313 = vcmask 138240
        %v314 = vsel %vm313, %v308, %v310
        %v315 = vsel %vm313, %v310, %v312
        %318 = vst [vmem:[#allocation2] sm:$0xff] %v314
        %319 = vst [vmem:[#allocation2 + $0x8] sm:$0xff] %v315
        %v320 = vld [vmem:[%s252] sm:$0xff]
        %v321 = vld [vmem:[%s252 + $0x8] sm:$0xf]
        %v322 = vld [vmem:[%s252 + $0x10] sm:$0xff]
        %v323 = vld [vmem:[%s252 + $0x18] sm:$0xf]
        %v324 = vld [vmem:[#allocation6] sm:$0x11]
        %v326 = vunpack.c.l.b16 %v324
        %v327 = vunpack.c.h.b16 %v324
        %v328 = vpack.c.b16 %v326, %v326
        %v329 = vpack.c.b16 %v327, %v327
        %v331 = vshrl.u32 %v328, 16
        %v332 = vpack.i.b16 %v331, %v331
        %v334 = vlaneseq
        %v335 = vshrl.u32 %v334, 7
        %v336 = vsub.s32 0, %v335
        %v337 = vrot.slane %v332, %v336
        %v339 = vshrl.u32 %v329, 16
        %v340 = vpack.i.b16 %v339, %v339
        %v342 = vlaneseq
        %v343 = vshrl.u32 %v342, 7
        %v344 = vsub.s32 0, %v343
        %v345 = vrot.slane %v340, %v344
        %v348 = vunpack.c.l.b16 %v337
        %v349 = vunpack.c.l.b16 %v345
        %v350 = vpack.c.b16 %v349, %v348
        %351 = vrot.lane.b32.xlu0 %v350, 112
        %v352 = vpop.permute.xlu0 %351
        %v353 = vrot.slane %v352, 4
        %vm354 = vcmask 916480
        %v355 = vsel %vm354, %v353, %v352
        %v358 = vmul.bf16 %v320, %v355
        %v359 = vmul.bf16 %v321, %v353
        %v360 = vmul.bf16 %v322, %v355
        %v361 = vmul.bf16 %v323, %v353
        %v366 = vunpack.c.l.b16 %v358
        %v367 = vunpack.c.h.b16 %v358
        %v368 = vunpack.c.l.b16 %v359
        %v369 = vunpack.c.l.b16 %v360
        %v370 = vunpack.c.h.b16 %v360
        %v371 = vunpack.c.l.b16 %v361
        %v372 = vpack.c.b16 %v369, %v366
        %v373 = vpack.c.b16 %v370, %v367
        %v374 = vpack.c.b16 %v371, %v368
        %375 = vrot.lane.b32.xlu0 %v372, 16
        %v376 = vpop.permute.xlu0 %375
        %377 = vrot.lane.b32.xlu0 %v373, 16
        %v378 = vpop.permute.xlu0 %377
        %379 = vrot.lane.b32.xlu0 %v374, 16
        %v380 = vpop.permute.xlu0 %379
        %vm381 = vcmask 130048
        %v382 = vsel %vm381, %v376, %v378
        %v383 = vsel %vm381, %v378, %v380
        %386 = vst [vmem:[#allocation2 + $0x10] sm:$0xff] %v382
        %387 = vst [vmem:[#allocation2 + $0x18] sm:$0xff] %v383
        %v388 = vld [vmem:[%s252] sm:$0xff]
        %v389 = vld [vmem:[%s252 + $0x8] sm:$0xf]
        %v390 = vld [vmem:[%s252 + $0x10] sm:$0xff]
        %v391 = vld [vmem:[%s252 + $0x18] sm:$0xf]
        %v392 = vld [vmem:[#allocation6] sm:$0x22]
        %v394 = vunpack.c.l.b16 %v392
        %v395 = vunpack.c.h.b16 %v392
        %v396 = vpack.c.b16 %v394, %v394
        %v397 = vpack.c.b16 %v395, %v395
        %v399 = vpack.i.b16 %v396, %v396
        %v401 = vlaneseq
        %v402 = vshrl.u32 %v401, 7
        %v403 = vsub.s32 1, %v402
        %v404 = vrot.slane %v399, %v403
        %v406 = vpack.i.b16 %v397, %v397
        %v408 = vlaneseq
        %v409 = vshrl.u32 %v408, 7
        %v410 = vsub.s32 1, %v409
        %v411 = vrot.slane %v406, %v410
        %v414 = vunpack.c.l.b16 %v404
        %v415 = vunpack.c.l.b16 %v411
        %v416 = vpack.c.b16 %v415, %v414
        %417 = vrot.lane.b32.xlu0 %v416, 113
        %v418 = vpop.permute.xlu0 %417
        %v419 = vrot.slane %v418, 4
        %vm420 = vcmask 924672
        %v421 = vsel %vm420, %v419, %v418
        %v424 = vmul.bf16 %v388, %v421
        %v425 = vmul.bf16 %v389, %v419
        %v426 = vmul.bf16 %v390, %v421
        %v427 = vmul.bf16 %v391, %v419
        %v432 = vunpack.c.l.b16 %v424
        %v433 = vunpack.c.h.b16 %v424
        %v434 = vunpack.c.l.b16 %v425
        %v435 = vunpack.c.l.b16 %v426
        %v436 = vunpack.c.h.b16 %v426
        %v437 = vunpack.c.l.b16 %v427
        %v438 = vpack.c.b16 %v435, %v432
        %v439 = vpack.c.b16 %v436, %v433
        %v440 = vpack.c.b16 %v437, %v434
        %441 = vrot.lane.b32.xlu0 %v438, 15
        %v442 = vpop.permute.xlu0 %441
        %443 = vrot.lane.b32.xlu0 %v439, 15
        %v444 = vpop.permute.xlu0 %443
        %445 = vrot.lane.b32.xlu0 %v440, 15
        %v446 = vpop.permute.xlu0 %445
        %vm447 = vcmask 121856
        %v448 = vsel %vm447, %v442, %v444
        %v449 = vsel %vm447, %v444, %v446
        %452 = vst [vmem:[#allocation2 + $0x20] sm:$0xff] %v448
        %453 = vst [vmem:[#allocation2 + $0x28] sm:$0xff] %v449
        %v454 = vld [vmem:[%s252] sm:$0xff]
        %v455 = vld [vmem:[%s252 + $0x8] sm:$0xf]
        %v456 = vld [vmem:[%s252 + $0x10] sm:$0xff]
        %v457 = vld [vmem:[%s252 + $0x18] sm:$0xf]
        %v458 = vld [vmem:[#allocation6] sm:$0x22]
        %v460 = vunpack.c.l.b16 %v458
        %v461 = vunpack.c.h.b16 %v458
        %v462 = vpack.c.b16 %v460, %v460
        %v463 = vpack.c.b16 %v461, %v461
        %v465 = vshrl.u32 %v462, 16
        %v466 = vpack.i.b16 %v465, %v465
        %v468 = vlaneseq
        %v469 = vshrl.u32 %v468, 7
        %v470 = vsub.s32 1, %v469
        %v471 = vrot.slane %v466, %v470
        %v473 = vshrl.u32 %v463, 16
        %v474 = vpack.i.b16 %v473, %v473
        %v476 = vlaneseq
        %v477 = vshrl.u32 %v476, 7
        %v478 = vsub.s32 1, %v477
        %v479 = vrot.slane %v474, %v478
        %v482 = vunpack.c.l.b16 %v471
        %v483 = vunpack.c.l.b16 %v479
        %v484 = vpack.c.b16 %v483, %v482
        %485 = vrot.lane.b32.xlu0 %v484, 127
        %v486 = vpop.permute.xlu0 %485
        %v487 = vrot.slane %v486, 4
        %vm488 = vcmask 1039360
        %v489 = vsel %vm488, %v487, %v486
        %v492 = vmul.bf16 %v454, %v489
        %v493 = vmul.bf16 %v455, %v487
        %v494 = vmul.bf16 %v456, %v489
        %v495 = vmul.bf16 %v457, %v487
        %v500 = vunpack.c.l.b16 %v492
        %v501 = vunpack.c.h.b16 %v492
        %v502 = vunpack.c.l.b16 %v493
        %v503 = vunpack.c.l.b16 %v494
        %v504 = vunpack.c.h.b16 %v494
        %v505 = vunpack.c.l.b16 %v495
        %v506 = vpack.c.b16 %v503, %v500
        %v507 = vpack.c.b16 %v504, %v501
        %v508 = vpack.c.b16 %v505, %v502
        %509 = vrot.lane.b32.xlu0 %v506, 1
        %v510 = vpop.permute.xlu0 %509
        %511 = vrot.lane.b32.xlu0 %v507, 1
        %v512 = vpop.permute.xlu0 %511
        %513 = vrot.lane.b32.xlu0 %v508, 1
        %v514 = vpop.permute.xlu0 %513
        %vm515 = vcmask 7168
        %v516 = vsel %vm515, %v510, %v512
        %v517 = vsel %vm515, %v512, %v514
        %520 = vst [vmem:[#allocation2 + $0x30] sm:$0xff] %v516
        %521 = vst [vmem:[#allocation2 + $0x38] sm:$0xff] %v517
        %v522 = vld [vmem:[%s252 + $0x4] sm:$0xff]
        %v523 = vld [vmem:[%s252 + $0x14] sm:$0xff]
        %v524 = vld [vmem:[#allocation6] sm:$0x44]
        %v526 = vunpack.c.l.b16 %v524
        %v527 = vunpack.c.h.b16 %v524
        %v528 = vpack.c.b16 %v526, %v526
        %v529 = vpack.c.b16 %v527, %v527
        %v531 = vpack.i.b16 %v528, %v528
        %v533 = vlaneseq
        %v534 = vshrl.u32 %v533, 7
        %v535 = vsub.s32 2, %v534
        %v536 = vrot.slane %v531, %v535
        %v538 = vpack.i.b16 %v529, %v529
        %v540 = vlaneseq
        %v541 = vshrl.u32 %v540, 7
        %v542 = vsub.s32 2, %v541
        %v543 = vrot.slane %v538, %v542
        %v546 = vunpack.c.l.b16 %v536
        %v547 = vunpack.c.l.b16 %v543
        %v548 = vpack.c.b16 %v547, %v546
        %v550 = vmul.bf16 %v522, %v548
        %v551 = vmul.bf16 %v523, %v548
        %v554 = vunpack.c.l.b16 %v550
        %v555 = vunpack.c.h.b16 %v550
        %v556 = vunpack.c.l.b16 %v551
        %v557 = vunpack.c.h.b16 %v551
        %v558 = vpack.c.b16 %v556, %v554
        %v559 = vpack.c.b16 %v557, %v555
        %562 = vst [vmem:[#allocation2 + $0x40] sm:$0xff] %v558
        %563 = vst [vmem:[#allocation2 + $0x48] sm:$0xff] %v559
        %v564 = vld [vmem:[%s252 + $0x4] sm:$0xff]
        %v565 = vld [vmem:[%s252 + $0xc] sm:$0xf]
        %v566 = vld [vmem:[%s252 + $0x14] sm:$0xff]
        %v567 = vld [vmem:[%s252 + $0x1c] sm:$0xf]
        %v568 = vld [vmem:[#allocation6] sm:$0x44]
        %v570 = vunpack.c.l.b16 %v568
        %v571 = vunpack.c.h.b16 %v568
        %v572 = vpack.c.b16 %v570, %v570
        %v573 = vpack.c.b16 %v571, %v571
        %v575 = vshrl.u32 %v572, 16
        %v576 = vpack.i.b16 %v575, %v575
        %v578 = vlaneseq
        %v579 = vshrl.u32 %v578, 7
        %v580 = vsub.s32 2, %v579
        %v581 = vrot.slane %v576, %v580
        %v583 = vshrl.u32 %v573, 16
        %v584 = vpack.i.b16 %v583, %v583
        %v586 = vlaneseq
        %v587 = vshrl.u32 %v586, 7
        %v588 = vsub.s32 2, %v587
        %v589 = vrot.slane %v584, %v588
        %v592 = vunpack.c.l.b16 %v581
        %v593 = vunpack.c.l.b16 %v589
        %v594 = vpack.c.b16 %v593, %v592
        %595 = vrot.lane.b32.xlu0 %v594, 1
        %v596 = vpop.permute.xlu0 %595
        %v597 = vrot.slane %v596, 4
        %v598 = vsel %vm515, %v597, %v596
        %v601 = vmul.bf16 %v564, %v598
        %v602 = vmul.bf16 %v565, %v597
        %v603 = vmul.bf16 %v566, %v598
        %v604 = vmul.bf16 %v567, %v597
        %v609 = vunpack.c.l.b16 %v601
        %v610 = vunpack.c.h.b16 %v601
        %v611 = vunpack.c.l.b16 %v602
        %v612 = vunpack.c.l.b16 %v603
        %v613 = vunpack.c.h.b16 %v603
        %v614 = vunpack.c.l.b16 %v604
        %v615 = vpack.c.b16 %v612, %v609
        %v616 = vpack.c.b16 %v613, %v610
        %v617 = vpack.c.b16 %v614, %v611
        %618 = vrot.lane.b32.xlu0 %v615, 127
        %v619 = vpop.permute.xlu0 %618
        %620 = vrot.lane.b32.xlu0 %v616, 127
        %v621 = vpop.permute.xlu0 %620
        %622 = vrot.lane.b32.xlu0 %v617, 127
        %v623 = vpop.permute.xlu0 %622
        %v624 = vsel %vm488, %v619, %v621
        %v625 = vsel %vm488, %v621, %v623
        %628 = vst [vmem:[#allocation2 + $0x50] sm:$0xff] %v624
        %629 = vst [vmem:[#allocation2 + $0x58] sm:$0xff] %v625
        %v630 = vld [vmem:[%s252 + $0x4] sm:$0xff]
        %v631 = vld [vmem:[%s252 + $0xc] sm:$0xf]
        %v632 = vld [vmem:[%s252 + $0x14] sm:$0xff]
        %v633 = vld [vmem:[%s252 + $0x1c] sm:$0xf]
        %v634 = vld [vmem:[#allocation6] sm:$0x88]
        %v636 = vunpack.c.l.b16 %v634
        %v637 = vunpack.c.h.b16 %v634
        %v638 = vpack.c.b16 %v636, %v636
        %v639 = vpack.c.b16 %v637, %v637
        %v641 = vpack.i.b16 %v638, %v638
        %v643 = vlaneseq
        %v644 = vshrl.u32 %v643, 7
        %v645 = vsub.s32 3, %v644
        %v646 = vrot.slane %v641, %v645
        %v648 = vpack.i.b16 %v639, %v639
        %v650 = vlaneseq
        %v651 = vshrl.u32 %v650, 7
        %v652 = vsub.s32 3, %v651
        %v653 = vrot.slane %v648, %v652
        %v656 = vunpack.c.l.b16 %v646
        %v657 = vunpack.c.l.b16 %v653
        %v658 = vpack.c.b16 %v657, %v656
        %659 = vrot.lane.b32.xlu0 %v658, 15
        %v660 = vpop.permute.xlu0 %659
        %v661 = vrot.slane %v660, 4
        %v662 = vsel %vm447, %v661, %v660
        %v665 = vmul.bf16 %v630, %v662
        %v666 = vmul.bf16 %v631, %v661
        %v667 = vmul.bf16 %v632, %v662
        %v668 = vmul.bf16 %v633, %v661
        %v673 = vunpack.c.l.b16 %v665
        %v674 = vunpack.c.h.b16 %v665
        %v675 = vunpack.c.l.b16 %v666
        %v676 = vunpack.c.l.b16 %v667
        %v677 = vunpack.c.h.b16 %v667
        %v678 = vunpack.c.l.b16 %v668
        %v679 = vpack.c.b16 %v676, %v673
        %v680 = vpack.c.b16 %v677, %v674
        %v681 = vpack.c.b16 %v678, %v675
        %682 = vrot.lane.b32.xlu0 %v679, 113
        %v683 = vpop.permute.xlu0 %682
        %684 = vrot.lane.b32.xlu0 %v680, 113
        %v685 = vpop.permute.xlu0 %684
        %686 = vrot.lane.b32.xlu0 %v681, 113
        %v687 = vpop.permute.xlu0 %686
        %v688 = vsel %vm420, %v683, %v685
        %v689 = vsel %vm420, %v685, %v687
        %692 = vst [vmem:[#allocation2 + $0x60] sm:$0xff] %v688
        %693 = vst [vmem:[#allocation2 + $0x68] sm:$0xff] %v689
        %v694 = vld [vmem:[%s252 + $0x4] sm:$0xff]
        %v695 = vld [vmem:[%s252 + $0xc] sm:$0xf]
        %v696 = vld [vmem:[%s252 + $0x14] sm:$0xff]
        %v697 = vld [vmem:[%s252 + $0x1c] sm:$0xf]
        %v698 = vld [vmem:[#allocation6] sm:$0x88]
        %v700 = vunpack.c.l.b16 %v698
        %v701 = vunpack.c.h.b16 %v698
        %v702 = vpack.c.b16 %v700, %v700
        %v703 = vpack.c.b16 %v701, %v701
        %v705 = vshrl.u32 %v702, 16
        %v706 = vpack.i.b16 %v705, %v705
        %v708 = vlaneseq
        %v709 = vshrl.u32 %v708, 7
        %v710 = vsub.s32 3, %v709
        %v711 = vrot.slane %v706, %v710
        %v713 = vshrl.u32 %v703, 16
        %v714 = vpack.i.b16 %v713, %v713
        %v716 = vlaneseq
        %v717 = vshrl.u32 %v716, 7
        %v718 = vsub.s32 3, %v717
        %v719 = vrot.slane %v714, %v718
        %v722 = vunpack.c.l.b16 %v711
        %v723 = vunpack.c.l.b16 %v719
        %v724 = vpack.c.b16 %v723, %v722
        %725 = vrot.lane.b32.xlu0 %v724, 16
        %v726 = vpop.permute.xlu0 %725
        %v727 = vrot.slane %v726, 4
        %v728 = vsel %vm381, %v727, %v726
        %v731 = vmul.bf16 %v694, %v728
        %v732 = vmul.bf16 %v695, %v727
        %v733 = vmul.bf16 %v696, %v728
        %v734 = vmul.bf16 %v697, %v727
        %v739 = vunpack.c.l.b16 %v731
        %v740 = vunpack.c.h.b16 %v731
        %v741 = vunpack.c.l.b16 %v732
        %v742 = vunpack.c.l.b16 %v733
        %v743 = vunpack.c.h.b16 %v733
        %v744 = vunpack.c.l.b16 %v734
        %v745 = vpack.c.b16 %v742, %v739
        %v746 = vpack.c.b16 %v743, %v740
        %v747 = vpack.c.b16 %v744, %v741
        %748 = vrot.lane.b32.xlu0 %v745, 112
        %v749 = vpop.permute.xlu0 %748
        %750 = vrot.lane.b32.xlu0 %v746, 112
        %v751 = vpop.permute.xlu0 %750
        %752 = vrot.lane.b32.xlu0 %v747, 112
        %v753 = vpop.permute.xlu0 %752
        %v754 = vsel %vm354, %v749, %v751
        %v755 = vsel %vm354, %v751, %v753
        %758 = vst [vmem:[#allocation2 + $0x70] sm:$0xff] %v754
        %759 = vst [vmem:[#allocation2 + $0x78] sm:$0xff] %v755
        %v760 = vld [vmem:[%s252 + $0x4] sm:$0xff]
        %v761 = vld [vmem:[%s252 + $0xc] sm:$0xf]
        %v762 = vld [vmem:[%s252 + $0x14] sm:$0xff]
        %v763 = vld [vmem:[%s252 + $0x1c] sm:$0xf]
        %v764 = vld [vmem:[#allocation6 + $0x8] sm:$0x11]
        %v766 = vunpack.c.l.b16 %v764
        %v767 = vunpack.c.h.b16 %v764
        %v768 = vpack.c.b16 %v766, %v766
        %v769 = vpack.c.b16 %v767, %v767
        %v771 = vpack.i.b16 %v768, %v768
        %v773 = vlaneseq
        %v774 = vshrl.u32 %v773, 7
        %v775 = vsub.s32 0, %v774
        %v776 = vrot.slane %v771, %v775
        %v778 = vpack.i.b16 %v769, %v769
        %v780 = vlaneseq
        %v781 = vshrl.u32 %v780, 7
        %v782 = vsub.s32 0, %v781
        %v783 = vrot.slane %v778, %v782
        %v786 = vunpack.c.l.b16 %v776
        %v787 = vunpack.c.l.b16 %v783
        %v788 = vpack.c.b16 %v787, %v786
        %789 = vrot.lane.b32.xlu0 %v788, 17
        %v790 = vpop.permute.xlu0 %789
        %v791 = vrot.slane %v790, 4
        %v792 = vsel %vm313, %v791, %v790
        %v795 = vmul.bf16 %v760, %v792
        %v796 = vmul.bf16 %v761, %v791
        %v797 = vmul.bf16 %v762, %v792
        %v798 = vmul.bf16 %v763, %v791
        %v803 = vunpack.c.l.b16 %v795
        %v804 = vunpack.c.h.b16 %v795
        %v805 = vunpack.c.l.b16 %v796
        %v806 = vunpack.c.l.b16 %v797
        %v807 = vunpack.c.h.b16 %v797
        %v808 = vunpack.c.l.b16 %v798
        %v809 = vpack.c.b16 %v806, %v803
        %v810 = vpack.c.b16 %v807, %v804
        %v811 = vpack.c.b16 %v808, %v805
        %812 = vrot.lane.b32.xlu0 %v809, 111
        %v813 = vpop.permute.xlu0 %812
        %814 = vrot.lane.b32.xlu0 %v810, 111
        %v815 = vpop.permute.xlu0 %814
        %816 = vrot.lane.b32.xlu0 %v811, 111
        %v817 = vpop.permute.xlu0 %816
        %v818 = vsel %vm286, %v813, %v815
        %v819 = vsel %vm286, %v815, %v817
        %822 = vst [vmem:[#allocation2 + $0x80] sm:$0xff] %v818
        %823 = vst [vmem:[#allocation2 + $0x88] sm:$0xff] %v819
        %v824 = vld [vmem:[#allocation3] sm:$0xff]
        %v825 = vld [vmem:[#allocation3 + $0x8] sm:$0xff]
        %v826 = vld [vmem:[#allocation3 + $0x10] sm:$0xff]
        %v827 = vld [vmem:[#allocation3 + $0x18] sm:$0xff]
        %v828 = vld [vmem:[#allocation3 + $0x20] sm:$0xff]
        %v829 = vld [vmem:[#allocation3 + $0x28] sm:$0xff]
        %v830 = vld [vmem:[#allocation3 + $0x30] sm:$0xff]
        %v831 = vld [vmem:[#allocation3 + $0x38] sm:$0xff]
        %v832 = vld [vmem:[#allocation2] sm:$0xff]
        %v833 = vld [vmem:[#allocation2 + $0x8] sm:$0xff]
        %v834 = vld [vmem:[#allocation2 + $0x10] sm:$0xff]
        %v835 = vld [vmem:[#allocation2 + $0x18] sm:$0xff]
        %v836 = vld [vmem:[#allocation2 + $0x20] sm:$0xff]
        %v837 = vld [vmem:[#allocation2 + $0x28] sm:$0xff]
        %v838 = vld [vmem:[#allocation2 + $0x30] sm:$0xff]
        %v839 = vld [vmem:[#allocation2 + $0x38] sm:$0xff]
        %v840 = vld [vmem:[#allocation2 + $0x40] sm:$0xff]
        %v841 = vld [vmem:[#allocation2 + $0x48] sm:$0xff]
        %v842 = vld [vmem:[#allocation2 + $0x50] sm:$0xff]
        %v843 = vld [vmem:[#allocation2 + $0x58] sm:$0xff]
        %v844 = vld [vmem:[#allocation2 + $0x60] sm:$0xff]
        %v845 = vld [vmem:[#allocation2 + $0x68] sm:$0xff]
        %v846 = vld [vmem:[#allocation2 + $0x70] sm:$0xff]
        %v847 = vld [vmem:[#allocation2 + $0x78] sm:$0xff]
        %v848 = vld [vmem:[#allocation2 + $0x80] sm:$0xff]
        %v849 = vld [vmem:[#allocation2 + $0x88] sm:$0xff]
        %v850 = vld [vmem:[%s2] sm:$0xff]
        %v851 = vld [vmem:[%s2 + $0x8] sm:$0xff]
        %v852 = vld [vmem:[%s2 + $0x10] sm:$0xff]
        %v853 = vld [vmem:[%s2 + $0x18] sm:$0xff]
        %v854 = vld [vmem:[%s2 + $0x20] sm:$0xff]
        %v855 = vld [vmem:[%s2 + $0x28] sm:$0xff]
        %v856 = vld [vmem:[%s2 + $0x30] sm:$0xff]
        %v857 = vld [vmem:[%s2 + $0x38] sm:$0xff]
        %859 = vset.pattern.permute.xlu0 0
        %860 = vperm.xlu0 %859, %v850
        %v861 = vpop.permute.xlu0 %860
        %864 = vset.pattern.permute.xlu0 0
        %865 = vperm.xlu0 %864, %v851
        %v866 = vpop.permute.xlu0 %865
        %869 = vset.pattern.permute.xlu0 0
        %870 = vperm.xlu0 %869, %v852
        %v871 = vpop.permute.xlu0 %870
        %874 = vset.pattern.permute.xlu0 0
        %875 = vperm.xlu0 %874, %v853
        %v876 = vpop.permute.xlu0 %875
        %879 = vset.pattern.permute.xlu0 0
        %880 = vperm.xlu0 %879, %v854
        %v881 = vpop.permute.xlu0 %880
        %884 = vset.pattern.permute.xlu0 0
        %885 = vperm.xlu0 %884, %v855
        %v886 = vpop.permute.xlu0 %885
        %889 = vset.pattern.permute.xlu0 0
        %890 = vperm.xlu0 %889, %v856
        %v891 = vpop.permute.xlu0 %890
        %894 = vset.pattern.permute.xlu0 0
        %895 = vperm.xlu0 %894, %v857
        %v896 = vpop.permute.xlu0 %895
        %v906 = vunpack.c.l.b16 %v824
        %v907 = vunpack.c.h.b16 %v824
        %v908 = vunpack.c.l.b16 %v825
        %v909 = vunpack.c.h.b16 %v825
        %v910 = vunpack.c.l.b16 %v826
        %v911 = vunpack.c.h.b16 %v826
        %v912 = vunpack.c.l.b16 %v827
        %v913 = vunpack.c.h.b16 %v827
        %v914 = vunpack.c.l.b16 %v828
        %v915 = vunpack.c.h.b16 %v828
        %v916 = vunpack.c.l.b16 %v829
        %v917 = vunpack.c.h.b16 %v829
        %v918 = vunpack.c.l.b16 %v830
        %v919 = vunpack.c.h.b16 %v830
        %v920 = vunpack.c.l.b16 %v831
        %v921 = vunpack.c.h.b16 %v831
        %v922 = vpack.c.b16 %v908, %v906
        %v923 = vpack.c.b16 %v909, %v907
        %v924 = vpack.c.b16 %v912, %v910
        %v925 = vpack.c.b16 %v913, %v911
        %v926 = vpack.c.b16 %v916, %v914
        %v927 = vpack.c.b16 %v917, %v915
        %v928 = vpack.c.b16 %v920, %v918
        %v929 = vpack.c.b16 %v921, %v919
        %vm934 = vcmask 130048
        %v936 = vsel %vm934, %v923, 0
        %v939 = vsel %vm934, %v925, 0
        %v942 = vsel %vm934, %v927, 0
        %v945 = vsel %vm934, %v929, 0
        %947 = vmatprep.subr.bf16.mxu0 %v833
        %948 = vmatpush1.bf16.msra.mxu0 %v832
        %949 = vmatprep.subr.bf16.mxu0 %v835
        %950 = vmatpush1.bf16.msra.mxu0 %v834
        %951 = vmatprep.subr.bf16.mxu0 %v837
        %952 = vmatpush1.bf16.msra.mxu0 %v836
        %953 = vmatprep.subr.bf16.mxu0 %v839
        %954 = vmatpush1.bf16.msra.mxu0 %v838
        %955 = vmatprep.subr.bf16.mxu0 %v841
        %956 = vmatpush1.bf16.msra.mxu0 %v840
        %957 = vmatprep.subr.bf16.mxu0 %v843
        %958 = vmatpush1.bf16.msra.mxu0 %v842
        %959 = vmatprep.subr.bf16.mxu0 %v845
        %960 = vmatpush1.bf16.msra.mxu0 %v844
        %961 = vmatprep.subr.bf16.mxu0 %v847
        %962 = vmatpush1.bf16.msra.mxu0 %v846
        %963 = vmatprep.subr.bf16.mxu0 %v849
        %964 = vmatpush1.bf16.msra.mxu0 %v848
        %965 = vmatprep.subr.bf16.mxu0 0
        %966 = vmatpush1.bf16.msra.mxu0 0
        %967 = vmatprep.subr.bf16.mxu0 0
        %968 = vmatpush1.bf16.msra.mxu0 0
        %969 = vmatprep.subr.bf16.mxu0 0
        %970 = vmatpush1.bf16.msra.mxu0 0
        %971 = vmatprep.subr.bf16.mxu0 0
        %972 = vmatpush1.bf16.msra.mxu0 0
        %973 = vmatprep.subr.bf16.mxu0 0
        %974 = vmatpush1.bf16.msra.mxu0 0
        %975 = vmatprep.subr.bf16.mxu0 0
        %976 = vmatpush1.bf16.msra.mxu0 0
        %977 = vmatprep.subr.bf16.mxu0 0
        %978 = vmatpush1.bf16.msra.mxu0 0
        %979 = vmatprep.mubr.bf16.mxu0 %v936
        %980 = vmatmul.mubr.bf16.gmra.mrb[0].mxu0 %v922
        %v981 = vpop.f32.mrb[0].mxu0
        %v982 = vadd.f32 %v861, %v981
        %v983 = vpop.f32.mrb[0].mxu0
        %v984 = vadd.f32 %v861, %v983
        %v985 = vpop.f32.mrb[0].mxu0
        %v986 = vadd.f32 %v866, %v985
        %v987 = vpop.f32.mrb[0].mxu0
        %v988 = vadd.f32 %v866, %v987
        %989 = vmatprep.mubr.bf16.mxu0 %v939
        %990 = vmatmul.mubr.bf16.gmra.mrb[0].mxu0 %v924
        %v991 = vpop.f32.mrb[0].mxu0
        %v992 = vadd.f32 %v871, %v991
        %v993 = vpop.f32.mrb[0].mxu0
        %v994 = vadd.f32 %v871, %v993
        %v995 = vpop.f32.mrb[0].mxu0
        %v996 = vadd.f32 %v876, %v995
        %v997 = vpop.f32.mrb[0].mxu0
        %v998 = vadd.f32 %v876, %v997
        %999 = vmatprep.mubr.bf16.mxu0 %v942
        %1000 = vmatmul.mubr.bf16.gmra.mrb[0].mxu0 %v926
        %v1001 = vpop.f32.mrb[0].mxu0
        %v1002 = vadd.f32 %v881, %v1001
        %v1003 = vpop.f32.mrb[0].mxu0
        %v1004 = vadd.f32 %v881, %v1003
        %v1005 = vpop.f32.mrb[0].mxu0
        %v1006 = vadd.f32 %v886, %v1005
        %v1007 = vpop.f32.mrb[0].mxu0
        %v1008 = vadd.f32 %v886, %v1007
        %1009 = vmatprep.mubr.bf16.mxu0 %v945
        %1010 = vmatmul.mubr.bf16.gmra.mrb[0].mxu0 %v928
        %v1011 = vpop.f32.mrb[0].mxu0
        %v1012 = vadd.f32 %v891, %v1011
        %v1013 = vpop.f32.mrb[0].mxu0
        %v1014 = vadd.f32 %v891, %v1013
        %v1015 = vpop.f32.mrb[0].mxu0
        %v1016 = vadd.f32 %v896, %v1015
        %v1017 = vpop.f32.mrb[0].mxu0
        %v1018 = vadd.f32 %v896, %v1017
        %1019 = vdwg.mxu0
        %v1020 = vadd.f32 %v982, %v984
        %1021 = vadd.xlane.f32.xlu0 %v1020
        %v1022 = vpop.xlane.xlu0 %1021
        %v1023 = vadd.f32 %v986, %v988
        %1024 = vadd.xlane.f32.xlu0 %v1023
        %v1025 = vpop.xlane.xlu0 %1024
        %v1026 = vadd.f32 %v992, %v994
        %1027 = vadd.xlane.f32.xlu0 %v1026
        %v1028 = vpop.xlane.xlu0 %1027
        %v1029 = vadd.f32 %v996, %v998
        %1030 = vadd.xlane.f32.xlu0 %v1029
        %v1031 = vpop.xlane.xlu0 %1030
        %v1032 = vadd.f32 %v1002, %v1004
        %1033 = vadd.xlane.f32.xlu0 %v1032
        %v1034 = vpop.xlane.xlu0 %1033
        %v1035 = vadd.f32 %v1006, %v1008
        %1036 = vadd.xlane.f32.xlu0 %v1035
        %v1037 = vpop.xlane.xlu0 %1036
        %v1038 = vadd.f32 %v1012, %v1014
        %1039 = vadd.xlane.f32.xlu0 %v1038
        %v1040 = vpop.xlane.xlu0 %1039
        %v1041 = vadd.f32 %v1016, %v1018
        %1042 = vadd.xlane.f32.xlu0 %v1041
        %v1043 = vpop.xlane.xlu0 %1042
        %v1044 = vmul.f32 %v1022, 0.00390625
        %v1045 = vmul.f32 %v1025, 0.00390625
        %v1046 = vmul.f32 %v1028, 0.00390625
        %v1047 = vmul.f32 %v1031, 0.00390625
        %v1048 = vmul.f32 %v1034, 0.00390625
        %v1049 = vmul.f32 %v1037, 0.00390625
        %v1050 = vmul.f32 %v1040, 0.00390625
        %v1051 = vmul.f32 %v1043, 0.00390625
        %v1052 = vmax.f32 %v982, %v984
        %1053 = vmax.xlane.f32.xlu0 %v1052
        %v1054 = vpop.xlane.xlu0 %1053
        %v1055 = vmax.f32 %v986, %v988
        %1056 = vmax.xlane.f32.xlu0 %v1055
        %v1057 = vpop.xlane.xlu0 %1056
        %v1058 = vmax.f32 %v992, %v994
        %1059 = vmax.xlane.f32.xlu0 %v1058
        %v1060 = vpop.xlane.xlu0 %1059
        %v1061 = vmax.f32 %v996, %v998
        %1062 = vmax.xlane.f32.xlu0 %v1061
        %v1063 = vpop.xlane.xlu0 %1062
        %v1064 = vmax.f32 %v1002, %v1004
        %1065 = vmax.xlane.f32.xlu0 %v1064
        %v1066 = vpop.xlane.xlu0 %1065
        %v1067 = vmax.f32 %v1006, %v1008
        %1068 = vmax.xlane.f32.xlu0 %v1067
        %v1069 = vpop.xlane.xlu0 %1068
        %v1070 = vmax.f32 %v1012, %v1014
        %1071 = vmax.xlane.f32.xlu0 %v1070
        %v1072 = vpop.xlane.xlu0 %1071
        %v1073 = vmax.f32 %v1016, %v1018
        %1074 = vmax.xlane.f32.xlu0 %v1073
        %v1075 = vpop.xlane.xlu0 %1074
        %v1076 = vadd.f32 %v1044, %v1054
        %v1077 = vadd.f32 %v1045, %v1057
        %v1078 = vadd.f32 %v1046, %v1060
        %v1079 = vadd.f32 %v1047, %v1063
        %v1080 = vadd.f32 %v1048, %v1066
        %v1081 = vadd.f32 %v1049, %v1069
        %v1082 = vadd.f32 %v1050, %v1072
        %v1083 = vadd.f32 %v1051, %v1075
        %v1084 = vmax.f32 %v1076, %v1080
        %v1085 = vmax.f32 %v1077, %v1081
        %v1086 = vmax.f32 %v1078, %v1082
        %v1087 = vmax.f32 %v1079, %v1083
        %v1088 = vsub.f32 %v1076, %v1084
        %v1089 = vsub.f32 %v1077, %v1085
        %v1090 = vsub.f32 %v1078, %v1086
        %v1091 = vsub.f32 %v1079, %v1087
        %v1092 = vmul.f32 %v1088, 1.442695
        %v1093 = vpow.pop %v1092
        %v1094 = vmul.f32 %v1089, 1.442695
        %v1095 = vpow.pop %v1094
        %v1096 = vmul.f32 %v1090, 1.442695
        %v1097 = vpow.pop %v1096
        %v1098 = vmul.f32 %v1091, 1.442695
        %v1099 = vpow.pop %v1098
        %v1100 = vsub.f32 %v1080, %v1084
        %v1101 = vsub.f32 %v1081, %v1085
        %v1102 = vsub.f32 %v1082, %v1086
        %v1103 = vsub.f32 %v1083, %v1087
        %v1104 = vmul.f32 %v1100, 1.442695
        %v1105 = vpow.pop %v1104
        %v1106 = vmul.f32 %v1101, 1.442695
        %v1107 = vpow.pop %v1106
        %v1108 = vmul.f32 %v1102, 1.442695
        %v1109 = vpow.pop %v1108
        %v1110 = vmul.f32 %v1103, 1.442695
        %v1111 = vpow.pop %v1110
        %v1112 = vadd.f32 %v1093, %v1105
        %v1113 = vadd.f32 %v1095, %v1107
        %v1114 = vadd.f32 %v1097, %v1109
        %v1115 = vadd.f32 %v1099, %v1111
        %v1116 = vrcp.pop %v1112
        %v1117 = vrcp.pop %v1113
        %v1118 = vrcp.pop %v1114
        %v1119 = vrcp.pop %v1115
        %v1120 = vmul.f32 %v1093, %v1116
        %v1121 = vmul.f32 %v1095, %v1117
        %v1122 = vmul.f32 %v1097, %v1118
        %v1123 = vmul.f32 %v1099, %v1119
        %v1124 = vmul.f32 %v1105, %v1116
        %v1125 = vmul.f32 %v1107, %v1117
        %v1126 = vmul.f32 %v1109, %v1118
        %v1127 = vmul.f32 %v1111, %v1119
        %1129 = vset.pattern.permute.xlu0 0
        %1130 = vperm.xlu0 %1129, %v1120
        %v1131 = vpop.permute.xlu0 %1130
        %1134 = vset.pattern.permute.xlu0 0
        %1135 = vperm.xlu0 %1134, %v1121
        %v1136 = vpop.permute.xlu0 %1135
        %1139 = vset.pattern.permute.xlu0 0
        %1140 = vperm.xlu0 %1139, %v1122
        %v1141 = vpop.permute.xlu0 %1140
        %1144 = vset.pattern.permute.xlu0 0
        %1145 = vperm.xlu0 %1144, %v1123
        %v1146 = vpop.permute.xlu0 %1145
        %1149 = vset.pattern.permute.xlu0 0
        %1150 = vperm.xlu0 %1149, %v1124
        %v1151 = vpop.permute.xlu0 %1150
        %1154 = vset.pattern.permute.xlu0 0
        %1155 = vperm.xlu0 %1154, %v1125
        %v1156 = vpop.permute.xlu0 %1155
        %1159 = vset.pattern.permute.xlu0 0
        %1160 = vperm.xlu0 %1159, %v1126
        %v1161 = vpop.permute.xlu0 %1160
        %1164 = vset.pattern.permute.xlu0 0
        %1165 = vperm.xlu0 %1164, %v1127
        %v1166 = vpop.permute.xlu0 %1165
        %v1168 = vmul.f32 %v982, %v1131
        %v1169 = vmul.f32 %v984, %v1131
        %v1170 = vmul.f32 %v986, %v1136
        %v1171 = vmul.f32 %v988, %v1136
        %v1172 = vmul.f32 %v992, %v1141
        %v1173 = vmul.f32 %v994, %v1141
        %v1174 = vmul.f32 %v996, %v1146
        %v1175 = vmul.f32 %v998, %v1146
        %v1176 = vmul.f32 %v1002, %v1151
        %v1177 = vmul.f32 %v1004, %v1151
        %v1178 = vmul.f32 %v1006, %v1156
        %v1179 = vmul.f32 %v1008, %v1156
        %v1180 = vmul.f32 %v1012, %v1161
        %v1181 = vmul.f32 %v1014, %v1161
        %v1182 = vmul.f32 %v1016, %v1166
        %v1183 = vmul.f32 %v1018, %v1166
        %1184 = vst [vmem:[%s247] sm:$0xff] %v1168
        %1185 = vst [vmem:[%s247 + $0x8] sm:$0xff] %v1169
        %1186 = vst [vmem:[%s247 + $0x10] sm:$0xff] %v1170
        %1187 = vst [vmem:[%s247 + $0x18] sm:$0xff] %v1171
        %1188 = vst [vmem:[%s247 + $0x20] sm:$0xff] %v1172
        %1189 = vst [vmem:[%s247 + $0x28] sm:$0xff] %v1173
        %1190 = vst [vmem:[%s247 + $0x30] sm:$0xff] %v1174
        %1191 = vst [vmem:[%s247 + $0x38] sm:$0xff] %v1175
        %1192 = vst [vmem:[%s247 + $0x40] sm:$0xff] %v1176
        %1193 = vst [vmem:[%s247 + $0x48] sm:$0xff] %v1177
        %1194 = vst [vmem:[%s247 + $0x50] sm:$0xff] %v1178
        %1195 = vst [vmem:[%s247 + $0x58] sm:$0xff] %v1179
        %1196 = vst [vmem:[%s247 + $0x60] sm:$0xff] %v1180
        %1197 = vst [vmem:[%s247 + $0x68] sm:$0xff] %v1181
        %1198 = vst [vmem:[%s247 + $0x70] sm:$0xff] %v1182
        %1199 = vst [vmem:[%s247 + $0x78] sm:$0xff] %v1183
        %s1200 = sand.u32 %s139, 1
        %s1201 = scalar_lea.sflag [#allocation5], %s1200
        %s1202 = sand.u32 %s139, 1
        %s1203 = smul.addr %s1202, 128
        %s1204 = scalar_lea.vmem [#allocation8], %s1203
        // Predicated region
        $region49: #{tpu_custom_call.1} parent=39 // pred_check
          %p1205 = pneg %p149
        $region50: #{tpu_custom_call.1} parent=39 // pred_check_branch
          %1207 = sbr.rel (%p1205) target = $region52
        $region51: #{tpu_custom_call.1} parent=39 // pred_region
          %s1209 = ssub.s32 2048, 2048
          %1210 = vsyncadd %s1201, %s1209
          %s1211 = smul.addr %s21, 16
          %s1212 = smul.addr %s1211, 128
          %s1213 = scalar_lea.hbm %s5, %s1212
          %s1214 = sshll.u32 %s1204, 4
          %s1215 = int_to_ptr.vmem [resolvable:$true] %s1214
          %1220 = dma.vmem_to_hbm [thread:$0]  %s1215, 2048, %s1213, %s1201, 256, 256, 16
        $region52: #{tpu_custom_call.1} parent=39 // pred_fallthru
          _
      $region40: #{tpu_custom_call.1} parent=5 // pred_fallthru
        _
      %p1221 = scmp.le.s32.totalorder 2, %s16
      // Predicated region
      $region53: #{tpu_custom_call.1} parent=5 // pred_check
        %p1222 = pneg %p1221
      $region54: #{tpu_custom_call.1} parent=5 // pred_check_branch
        %1224 = sbr.rel (%p1222) target = $region56
      $region55: #{tpu_custom_call.1} parent=5 // pred_region
        %s1225 = ssub.s32 %s16, 2
        // Predicated region
        $region57: #{tpu_custom_call.1} parent=55 // pred_check
          %p1226 = pneg %p155
        $region58: #{tpu_custom_call.1} parent=55 // pred_check_branch
          %1228 = sbr.rel (%p1226) target = $region60
        $region59: #{tpu_custom_call.1} parent=55 // pred_region
          %s1229 = sand.u32 %s140, 1
          %s1230 = scalar_lea.sflag [#allocation5], %s1229
          %s1231 = sand.u32 %s140, 1
          %s1232 = smul.addr %s1231, 128
          %s1233 = scalar_lea.vmem [#allocation8], %s1232
          %1234 = dma.done %s1230, 2048
        $region60: #{tpu_custom_call.1} parent=55 // pred_fallthru
          _
      $region56: #{tpu_custom_call.1} parent=5 // pred_fallthru
        _
    $region6: #{tpu_custom_call.1} parent=1 // loop_footer
      %s20 = sadd.s32 1, %s16
    $region7: #{tpu_custom_call.1} parent=1 // loop_footer_branch
      %15 = sbr.rel target = $region3
    $region8: #{tpu_custom_call.1} parent=1 // loop_exit
      _
    %1235 = vsyncpa [#allocation4], 1
    %s1236 = scalar_lea.sflag [#allocation4], 1
    %1237 = vsyncpa %s1236, 1
    %1238 = vsyncpa [#allocation7], 1
    %1239 = vsyncpa [#allocation5], 1
    %s1240 = scalar_lea.sflag [#allocation5], 1
    %1241 = vsyncpa %s1240, 1

</llo_original>
